<compile_context>
chip_gen: v6e
topology: v6e:2x2x1
jax: 0.10.0
libtpu: 0.0.40
codegen_flags: <defaults>
</compile_context>

<pallas_src>
import jax
import jax.numpy as jnp
from jax.experimental import pallas as pl
from jax.experimental.pallas import tpu as pltpu


def _cat_tanh_relu_kernel(x_ref, o_ref):
    # x_ref: (TB, F) flattened input tile, o_ref: (TB, 2F) output tile.
    f = x_ref.shape[-1]
    y = jax.nn.relu(jnp.tanh(x_ref[...]))
    # cat((x, x), dim=1).view(B, -1) == [y, y] along the last axis.
    # Two sub-stores of the same tile: one tanh per element, no concat
    # intermediate, no lane relayout.
    o_ref[:, :f] = y
    o_ref[:, f:] = y


def model_forward(x, *, vmem_budget_bytes=16 << 20):
    """x: (B, C, W) float32 -> (B, 2*C*W) float32 == relu(tanh(cat((x,x),1).view(B,-1)))."""
    b = x.shape[0]
    # Row-major flatten matches torch .view semantics for the concatenated tensor.
    x_flat = x.reshape(b, -1)
    f = x_flat.shape[1]
    itemsize = jnp.dtype(x.dtype).itemsize

    # Double-buffered per-step VMEM footprint: (TB*F in + TB*2F out) * itemsize * 2.
    per_row_bytes = 6 * f * itemsize
    tb_cap = max(8, (vmem_budget_bytes // per_row_bytes) // 8 * 8)

    use_grid = (b >= 16) and (b % 8 == 0)
    if use_grid:
        # Largest row-tile that is a multiple of 8, divides B, and fits the budget.
        tb = min(b, tb_cap)
        tb = (tb // 8) * 8
        while b % tb != 0:
            tb -= 8
        out = pl.pallas_call(
            _cat_tanh_relu_kernel,
            out_shape=jax.ShapeDtypeStruct((b, 2 * f), x.dtype),
            grid=(b // tb,),
            # Tile only over B; last dim full-extent so (8,128) rule is satisfied.
            in_specs=[pl.BlockSpec((tb, f), lambda i: (i, 0))],
            out_specs=pl.BlockSpec((tb, 2 * f), lambda i: (i, 0)),
            compiler_params=pltpu.CompilerParams(
                dimension_semantics=("parallel",)),
        )(x_flat)
    else:
        # Tiny problem: single full-array block, single grid point.
        out = pl.pallas_call(
            _cat_tanh_relu_kernel,
            out_shape=jax.ShapeDtypeStruct((b, 2 * f), x.dtype),
            in_specs=[pl.BlockSpec((b, f), lambda: (0, 0))],
            out_specs=pl.BlockSpec((b, 2 * f), lambda: (0, 0)),
        )(x_flat)
    return out


if __name__ == "__main__":
    key = jax.random.PRNGKey(0)
    # Shape implied by the module: x = torch.randn(3, 2, 2)
    x = jax.random.normal(key, (3, 2, 2), dtype=jnp.float32)

    out = model_forward(x)
    out = jax.block_until_ready(out)

    # Reference check in plain JAX (same semantics as the PyTorch forward).
    # TODO(synk): the module's arange(3).repeat(B) is dead code and is omitted.
    z = jnp.concatenate((x, x), axis=1)                       # (3, 4, 2)
    ref = jax.nn.relu(jnp.tanh(z.reshape(z.shape[0], -1)))    # (3, 8)
    assert out.shape == ref.shape
    assert jnp.allclose(out, ref, atol=1e-6), "mismatch vs reference"

    # Also exercise the scaled / gridded path once for coverage.
    xb = jax.random.normal(jax.random.PRNGKey(1), (1024, 2, 2), dtype=jnp.float32)
    ob = jax.block_until_ready(model_forward(xb))
    zb = jnp.concatenate((xb, xb), axis=1)
    refb = jax.nn.relu(jnp.tanh(zb.reshape(zb.shape[0], -1)))
    assert jnp.allclose(ob, refb, atol=1e-6), "mismatch vs reference (gridded path)"

    print("KERNEL_OK")
</pallas_src>

<mosaic_0001>
module attributes {stable_mosaic.version = 11 : i64} {
  func.func @_cat_tanh_relu_kernel(%arg0: memref<3x4xf32, #tpu.memory_space<vmem>>, %arg1: memref<3x8xf32, #tpu.memory_space<vmem>>) attributes {dimension_semantics = [], scalar_prefetch = 0 : i64, scratch_operands = 0 : i64, tpu.core_type = #tpu.core_type<tc>} {
    %c0 = arith.constant 0 : index
    %c0_0 = arith.constant 0 : index
    %0 = vector.load %arg0[%c0, %c0_0] : memref<3x4xf32, #tpu.memory_space<vmem>>, vector<3x4xf32>
    %1 = math.tanh %0 : vector<3x4xf32>
    %cst = arith.constant 0.000000e+00 : f32
    %2 = vector.broadcast %cst : f32 to vector<3x4xf32>
    %3 = arith.maximumf %1, %2 : vector<3x4xf32>
    %c0_1 = arith.constant 0 : index
    %c0_2 = arith.constant 0 : index
    %4 = vector.load %arg1[%c0_1, %c0_2] : memref<3x8xf32, #tpu.memory_space<vmem>>, vector<3x4xf32>
    tpu.vector_store %arg1[%c0_1, %c0_2], %3 {strides = array<i32>} : memref<3x8xf32, #tpu.memory_space<vmem>>, vector<3x4xf32>,
    %c0_3 = arith.constant 0 : index
    %c4 = arith.constant 4 : index
    %5 = vector.load %arg1[%c0_3, %c4] : memref<3x8xf32, #tpu.memory_space<vmem>>, vector<3x4xf32>
    tpu.vector_store %arg1[%c0_3, %c4], %3 {strides = array<i32>} : memref<3x8xf32, #tpu.memory_space<vmem>>, vector<3x4xf32>,
    return
  }
}

</mosaic_0001>

<llo_original>
// kernel: tpu_custom_call.1
$region0: #{tpu_custom_call.1}
  #allocation0 [shape = 'u32[]', space=smem, size = 0x4, offset = 0x4, fixed_abs, tag = 'smem constant byte address 0x4 - core index']
  #allocation1 [shape = 'u32[144,128]{1,0:T(1,128)}', space=vmem, size = 0x12000, scoped, tag = 'internal scratch']
  %s0 = inlined_call_operand.hbm [shape: f32[3,4], index: 0, kind: input, shape index: {}]
  %s1 = inlined_call_operand.hbm [shape: f32[3,8], index: 1, kind: output, shape index: {}]
  %s2 = sld [smem:[#allocation0]]
  $region18: #{tpu_custom_call.1} parent=0
    _
  %s4 = ssub.s32 1, %s2
  %s5 = scalar_select 0, %s4, %s2
  $region1: #{tpu_custom_call.1} parent=0
    #allocation2 [shape = 'u8[2048]{0}', space=vmem, size = 0x800, scoped, tag = 'input window, operand 0, single buffered']
    #allocation3 [shape = 's32[1]{0}', space=sflag, size = 0x4, scoped, tag = 'scoped memory for tpu_custom_call.1']
    #allocation4 [shape = 's32[1]{0}', space=sflag, size = 0x4, scoped, tag = 'scoped memory for tpu_custom_call.1']
    #allocation5 [shape = 'u8[2048]{0}', space=vmem, size = 0x800, scoped, tag = 'output window, operand 0, single buffered']
    %6 = vsyncpa [#allocation3], 0
    %7 = vsyncpa [#allocation4], 0
    // Predicated region
    $region2: #{tpu_custom_call.1} parent=1 // pred_check
      _
    $region3: #{tpu_custom_call.1} parent=1 // pred_check_branch
      %9 = sbr.rel (0) target = $region5
    $region4: #{tpu_custom_call.1} parent=1 // pred_region
      %s11 = ssub.s32 64, 64
      %12 = vsyncadd [#allocation3], %s11
      %s14 = sshll.u32 [#allocation2], 4
      %s15 = int_to_ptr.vmem [resolvable:$true] %s14
      %17 = dma.hbm_to_vmem [thread:$0]  %s0, 64, %s15, [#allocation3]
    $region5: #{tpu_custom_call.1} parent=1 // pred_fallthru
      _
    // Predicated region
    $region6: #{tpu_custom_call.1} parent=1 // pred_check
      _
    $region7: #{tpu_custom_call.1} parent=1 // pred_check_branch
      %19 = sbr.rel (0) target = $region9
    $region8: #{tpu_custom_call.1} parent=1 // pred_region
      %20 = dma.done [#allocation3], 64
    $region9: #{tpu_custom_call.1} parent=1 // pred_fallthru
      _
    %v21 = vld [vmem:[#allocation2] sm:$0x7]
    %v22 = vtanh.pop %v21
    %v23 = vmax.f32 %v22, 0.0
    %vm24 = vcmask 26624
    %25 = vst.msk [vmem:[#allocation5] sm:$0x7] %vm24, %v23
    %27 = vrot.lane.b32.xlu0 %v23, 4
    %v28 = vpop.permute.xlu0 %27
    %vm30 = vcmask 59424
    %31 = vst.msk [vmem:[#allocation5] sm:$0x7] %vm30, %v28
    // Predicated region
    $region10: #{tpu_custom_call.1} parent=1 // pred_check
      _
    $region11: #{tpu_custom_call.1} parent=1 // pred_check_branch
      %33 = sbr.rel (0) target = $region13
    $region12: #{tpu_custom_call.1} parent=1 // pred_region
      %s35 = ssub.s32 64, 64
      %36 = vsyncadd [#allocation4], %s35
      %s38 = sshll.u32 [#allocation5], 4
      %s39 = int_to_ptr.vmem [resolvable:$true] %s38
      %41 = dma.vmem_to_hbm [thread:$0]  %s39, 64, %s1, [#allocation4]
    $region13: #{tpu_custom_call.1} parent=1 // pred_fallthru
      _
    // Predicated region
    $region14: #{tpu_custom_call.1} parent=1 // pred_check
      _
    $region15: #{tpu_custom_call.1} parent=1 // pred_check_branch
      %43 = sbr.rel (0) target = $region17
    $region16: #{tpu_custom_call.1} parent=1 // pred_region
      %44 = dma.done [#allocation4], 64
    $region17: #{tpu_custom_call.1} parent=1 // pred_fallthru
      _
    %45 = vsyncpa [#allocation3], 1
    %46 = vsyncpa [#allocation4], 1

</llo_original>
